<compile_context>
chip_gen: v7x
topology: tpu7x:2x2x1
jax: 0.10.0
libtpu: 0.0.40
codegen_flags: <defaults>
</compile_context>

<pallas_src>
import jax
import jax.numpy as jnp
from jax.experimental import pallas as pl
from jax.experimental.pallas import tpu as pltpu


def _stable_temp_softmax_kernel(xp_ref, w_ref, b_ref, o_ref):
    # xp_ref: (tb, P*D)  packed activations (P original batch rows per lane-row)
    # w_ref : (P*D, 2P)  block-diagonal +/- weight-difference columns (resident)
    # b_ref : (1, 2P)    matching +/- bias-difference row (resident)
    # o_ref : (tb, 2P)   packed softmax output (free reshape to (P*tb, 2) outside)
    d = jnp.dot(xp_ref[...], w_ref[...], preferred_element_type=jnp.float32)
    d = d + b_ref[...]
    # sigmoid via tanh: one EUP op, numerically stable for all d; the two
    # columns of each row pair sum to 1.
    o_ref[...] = (0.5 * (jnp.tanh(0.5 * d) + 1.0)).astype(o_ref.dtype)


def _round_up(n, m):
    return ((n + m - 1) // m) * m


def _padded_tile_bytes(rows, cols, itemsize=4):
    """VMEM footprint of an f32 (rows, cols) buffer with (8,128) tile padding."""
    return _round_up(max(rows, 1), 8) * _round_up(max(cols, 1), 128) * itemsize


def _choose_block_rows(total_rows, db_bytes_per_row,
                       *, vmem_budget=16 << 20, min_steps=2):
    """Largest batch tile (multiple of 8) whose double-buffered PADDED x+out
    footprint fits `vmem_budget`, capped so the grid keeps >= min_steps steps
    (gives both v7x TensorCores work via the 'parallel' batch axis)."""
    rows = max(8, vmem_budget // max(1, db_bytes_per_row))
    half = max(8, _round_up(-(-total_rows // min_steps), 8))
    rows = min(rows, half)
    return max(8, (rows // 8) * 8)


def stable_temperature_softmax(x, weight, bias, temperature=2.0, *, block_rows=None):
    """x: (B, D) f32; weight: (2, D) f32 (PyTorch nn.Linear layout); bias: (2,) f32."""
    B, D = x.shape
    inv_t = jnp.float32(1.0 / float(temperature))

    w_diff = ((weight[1, :] - weight[0, :]) * inv_t).astype(jnp.float32)   # (D,)
    b_diff = ((bias[1] - bias[0]) * inv_t).astype(jnp.float32)             # scalar

    # Pack P = 128 // D original rows per lane-row when D divides 128 and the
    # batch divides P (keeps the x reshape a free contiguous view).
    pack = 128 // D if (D <= 128 and 128 % D == 0) else 1
    if pack > 1 and B % pack != 0:
        pack = 1
    Bp, Dp, Cp = B // pack, pack * D, 2 * pack

    xp = x.astype(jnp.float32).reshape(Bp, Dp)          # free row-major view

    # Block-diagonal packed weight: column 2k gets -w_diff in rows k*D:(k+1)*D,
    # column 2k+1 gets +w_diff, so sigmoid(xp @ W + b) is directly the packed
    # [out0, out1] pairs for all P rows of each lane-row.
    sign = jnp.asarray([-1.0, 1.0], jnp.float32)        # [class0, class1]
    blk = jnp.einsum("pk,d->pdk", jnp.eye(pack, dtype=jnp.float32), w_diff)
    w_pk = (blk.reshape(Dp, pack)[:, :, None] * sign).reshape(Dp, Cp)
    b_pk = (jnp.tile(sign, pack) * b_diff).reshape(1, Cp)

    itemsize = 4
    x_row = _round_up(Dp, 128) * itemsize                # padded bytes / packed row
    o_row = _round_up(Cp, 128) * itemsize                # out row pads to 128 lanes
    if block_rows is None:
        block_rows = _choose_block_rows(Bp, 2 * (x_row + o_row))
    block_rows = max(8, (int(block_rows) // 8) * 8)

    grid = (-(-Bp // block_rows),)    # cdiv; ragged edge block is masked by Pallas

    # VMEM accounting with (8,128) padding; every pipelined buffer counted x2.
    vmem_need = 2 * (
        _padded_tile_bytes(block_rows, Dp)
        + _padded_tile_bytes(block_rows, Cp)
        + _padded_tile_bytes(Dp, Cp)
        + _padded_tile_bytes(1, Cp)
    )
    vmem_limit = max(int(vmem_need * 1.2) + (1 << 20), 16 << 20)

    out_pk = pl.pallas_call(
        _stable_temp_softmax_kernel,
        out_shape=jax.ShapeDtypeStruct((Bp, Cp), jnp.float32),
        grid_spec=pltpu.PrefetchScalarGridSpec(
            num_scalar_prefetch=0,
            grid=grid,
            in_specs=[
                pl.BlockSpec((block_rows, Dp), lambda i: (i, 0)),   # streamed x tile
                pl.BlockSpec((Dp, Cp), lambda i: (0, 0)),           # resident packed W
                pl.BlockSpec((1, Cp), lambda i: (0, 0)),            # resident packed b
            ],
            out_specs=pl.BlockSpec((block_rows, Cp), lambda i: (i, 0)),
        ),
        compiler_params=pltpu.CompilerParams(
            dimension_semantics=("parallel",),   # batch axis shards across v7x TCs
            vmem_limit_bytes=vmem_limit,
        ),
    )(xp, w_pk, b_pk)

    return out_pk.reshape(B, 2)       # free view: (B/P, 2P) -> (B, 2)


def reference(x, weight, bias, temperature=2.0):
    logits = x @ weight.T + bias
    logits = logits - jnp.max(logits, axis=1, keepdims=True)
    logits = logits / temperature
    return jax.nn.softmax(logits, axis=1)


if __name__ == "__main__":
    key = jax.random.PRNGKey(0)
    D = 32
    temperature = 2.0

    kx, kw, kb = jax.random.split(key, 3)
    # Deterministic nn.Linear-style init: U(-1/sqrt(D), 1/sqrt(D)).
    bound = 1.0 / (D ** 0.5)
    weight = jax.random.uniform(kw, (2, D), jnp.float32, -bound, bound)
    bias = jax.random.uniform(kb, (2,), jnp.float32, -bound, bound)

    checks = [
        (16, None),   # packed path (P=4), single tile, auto block size
        (13, None),   # B % P != 0 -> unpacked fallback, ragged edge block
        (48, 8),      # packed path, multi-step grid with explicit small tile
    ]
    for B, blk in checks:
        x = jax.random.normal(jax.random.fold_in(kx, B), (B, D), dtype=jnp.float32)
        out = stable_temperature_softmax(x, weight, bias, temperature, block_rows=blk)
        out = jax.block_until_ready(out)
        ref = reference(x, weight, bias, temperature)
        assert out.shape == (B, 2)
        assert jnp.allclose(out, ref, atol=1e-5, rtol=1e-5), f"mismatch vs reference (B={B})"
        assert jnp.allclose(jnp.sum(out, axis=1), 1.0, atol=1e-6)

    print("KERNEL_OK")
</pallas_src>

<mosaic_0001>
module attributes {stable_mosaic.version = 11 : i64} {
  func.func @_stable_temp_softmax_kernel(%arg0: i32, %arg1: memref<8x128xf32, #tpu.memory_space<vmem>>, %arg2: memref<128x8xf32, #tpu.memory_space<vmem>>, %arg3: memref<1x8xf32, #tpu.memory_space<vmem>>, %arg4: memref<8x8xf32, #tpu.memory_space<vmem>>) attributes {dimension_semantics = [#tpu.dimension_semantics<parallel>], iteration_bounds = array<i64: 1>, scalar_prefetch = 0 : i64, scratch_operands = 0 : i64, tpu.core_type = #tpu.core_type<tc>, window_params = [{transform_indices = @transform_0, window_bounds = array<i64: 8, 128>}, {pipeline_mode = #tpu.pipeline_mode<synchronous>, transform_indices = @transform_1, window_bounds = array<i64: 128, 8>}, {pipeline_mode = #tpu.pipeline_mode<synchronous>, transform_indices = @transform_2, window_bounds = array<i64: 1, 8>}, {transform_indices = @transform_3, window_bounds = array<i64: 8, 8>}]} {
    %c0 = arith.constant 0 : index
    %c0_0 = arith.constant 0 : index
    %0 = vector.load %arg1[%c0, %c0_0] : memref<8x128xf32, #tpu.memory_space<vmem>>, vector<8x128xf32>
    %c0_1 = arith.constant 0 : index
    %c0_2 = arith.constant 0 : index
    %1 = vector.load %arg2[%c0_1, %c0_2] : memref<128x8xf32, #tpu.memory_space<vmem>>, vector<128x8xf32>
    %cst = arith.constant dense<0.000000e+00> : vector<8x8xf32>
    %2 = tpu.matmul %0, %1, %cst {dimension_numbers = #tpu.dot_dimension_numbers<[1], [0], [0], [1], [0, 0, 1, 1], [], []>} : vector<8x128xf32>, vector<128x8xf32>, vector<8x8xf32> -> vector<8x8xf32>
    %c0_3 = arith.constant 0 : index
    %c0_4 = arith.constant 0 : index
    %3 = vector.load %arg3[%c0_3, %c0_4] : memref<1x8xf32, #tpu.memory_space<vmem>>, vector<1x8xf32>
    %4 = vector.broadcast %3 : vector<1x8xf32> to vector<8x8xf32>
    %5 = arith.addf %2, %4 : vector<8x8xf32>
    %cst_5 = arith.constant 5.000000e-01 : f32
    %6 = vector.broadcast %cst_5 : f32 to vector<8x8xf32>
    %7 = arith.mulf %6, %5 : vector<8x8xf32>
    %8 = math.tanh %7 : vector<8x8xf32>
    %cst_6 = arith.constant 1.000000e+00 : f32
    %9 = vector.broadcast %cst_6 : f32 to vector<8x8xf32>
    %10 = arith.addf %8, %9 : vector<8x8xf32>
    %cst_7 = arith.constant 5.000000e-01 : f32
    %11 = vector.broadcast %cst_7 : f32 to vector<8x8xf32>
    %12 = arith.mulf %11, %10 : vector<8x8xf32>
    %c0_8 = arith.constant 0 : index
    %c0_9 = arith.constant 0 : index
    %13 = vector.load %arg4[%c0_8, %c0_9] : memref<8x8xf32, #tpu.memory_space<vmem>>, vector<8x8xf32>
    tpu.vector_store %arg4[%c0_8, %c0_9], %12 {strides = array<i32>} : memref<8x8xf32, #tpu.memory_space<vmem>>, vector<8x8xf32>,
    return
  }
  func.func @transform_0(%arg0: i32) -> (i32, i32) {
    %c0_i32 = arith.constant 0 : i32
    %c0_i32_0 = arith.constant 0 : i32
    return %arg0, %c0_i32 : i32, i32
  }
  func.func @transform_1(%arg0: i32) -> (i32, i32) {
    %c0_i32 = arith.constant 0 : i32
    %c0_i32_0 = arith.constant 0 : i32
    %c0_i32_1 = arith.constant 0 : i32
    return %c0_i32, %c0_i32_0 : i32, i32
  }
  func.func @transform_2(%arg0: i32) -> (i32, i32) {
    %c0_i32 = arith.constant 0 : i32
    %c0_i32_0 = arith.constant 0 : i32
    %c0_i32_1 = arith.constant 0 : i32
    return %c0_i32, %c0_i32_0 : i32, i32
  }
  func.func @transform_3(%arg0: i32) -> (i32, i32) {
    %c0_i32 = arith.constant 0 : i32
    %c0_i32_0 = arith.constant 0 : i32
    return %arg0, %c0_i32 : i32, i32
  }
}

</mosaic_0001>

<llo_original>
// kernel: tpu_custom_call.1
$region0: #{tpu_custom_call.1}
  #allocation0 [shape = 'u32[]', space=smem, size = 0x4, offset = 0x4, fixed_abs, tag = 'smem constant byte address 0x4 - core index']
  #allocation1 [shape = 'u32[144,128]{1,0:T(1,128)}', space=vmem, size = 0x12000, scoped, tag = 'internal scratch']
  %s0 = inlined_call_operand.vmem [shape: f32[4,128], index: 0, kind: input, shape index: {}]
  %s1 = inlined_call_operand.vmem [shape: f32[128,8], index: 1, kind: input, shape index: {}]
  %s2 = inlined_call_operand.vmem [shape: f32[1,8], index: 2, kind: input, shape index: {}]
  %s3 = inlined_call_operand.hbm [shape: f32[4,8], index: 3, kind: output, shape index: {}]
  %s4 = sld [smem:[#allocation0]]
  $region22: #{tpu_custom_call.1} parent=0
    _
  %s6 = ssub.s32 1, %s4
  %s7 = scalar_select 0, %s6, %s4
  $region1: #{tpu_custom_call.1} parent=0
    #allocation2 [shape = 'u8[4096]{0}', space=vmem, size = 0x1000, scoped, tag = 'output window, operand 0, single buffered']
    #allocation3 [shape = 's32[1]{0}', space=sflag, size = 0x4, scoped, tag = 'scoped memory for tpu_custom_call.1']
    %8 = vsyncpa [#allocation3], 0
    // Predicated region
    $region2: #{tpu_custom_call.1} parent=1 // pred_check
      _
    $region3: #{tpu_custom_call.1} parent=1 // pred_check_branch
      %10 = sbr.rel (0) target = $region5
    $region4: #{tpu_custom_call.1} parent=1 // pred_region
      _
    $region5: #{tpu_custom_call.1} parent=1 // pred_fallthru
      _
    // Predicated region
    $region6: #{tpu_custom_call.1} parent=1 // pred_check
      _
    $region7: #{tpu_custom_call.1} parent=1 // pred_check_branch
      %12 = sbr.rel (0) target = $region9
    $region8: #{tpu_custom_call.1} parent=1 // pred_region
      _
    $region9: #{tpu_custom_call.1} parent=1 // pred_fallthru
      _
    // Predicated region
    $region10: #{tpu_custom_call.1} parent=1 // pred_check
      _
    $region11: #{tpu_custom_call.1} parent=1 // pred_check_branch
      %14 = sbr.rel (0) target = $region13
    $region12: #{tpu_custom_call.1} parent=1 // pred_region
      _
    $region13: #{tpu_custom_call.1} parent=1 // pred_fallthru
      _
    %v15 = vld [vmem:[%s0] sm:$0xff]
    %v16 = vld [vmem:[%s1] sm:$0xff]
    %v17 = vld [vmem:[%s1 + $0x8] sm:$0xff]
    %v18 = vld [vmem:[%s1 + $0x10] sm:$0xff]
    %v19 = vld [vmem:[%s1 + $0x18] sm:$0xff]
    %v20 = vld [vmem:[%s1 + $0x20] sm:$0xff]
    %v21 = vld [vmem:[%s1 + $0x28] sm:$0xff]
    %v22 = vld [vmem:[%s1 + $0x30] sm:$0xff]
    %v23 = vld [vmem:[%s1 + $0x38] sm:$0xff]
    %v24 = vld [vmem:[%s1 + $0x40] sm:$0xff]
    %v25 = vld [vmem:[%s1 + $0x48] sm:$0xff]
    %v26 = vld [vmem:[%s1 + $0x50] sm:$0xff]
    %v27 = vld [vmem:[%s1 + $0x58] sm:$0xff]
    %v28 = vld [vmem:[%s1 + $0x60] sm:$0xff]
    %v29 = vld [vmem:[%s1 + $0x68] sm:$0xff]
    %v30 = vld [vmem:[%s1 + $0x70] sm:$0xff]
    %v31 = vld [vmem:[%s1 + $0x78] sm:$0xff]
    %v32 = vld [vmem:[%s2] sm:$0x1]
    %v34 = vlaneseq
    %v35 = vshrl.u32 %v34, 7
    %v36 = vsub.s32 0, %v35
    %v37 = vrot.slane %v32, %v36
    %39 = vmatprep.subr.mxu0 0.0
    %40 = vmatpush1.msra.mxu0 %v16
    %41 = vmatprep.subr.mxu0 0.0
    %42 = vmatpush1.msra.mxu0 %v17
    %43 = vmatprep.subr.mxu0 0.0
    %44 = vmatpush1.msra.mxu0 %v18
    %45 = vmatprep.subr.mxu0 0.0
    %46 = vmatpush1.msra.mxu0 %v19
    %47 = vmatprep.subr.mxu0 0.0
    %48 = vmatpush1.msra.mxu0 %v20
    %49 = vmatprep.subr.mxu0 0.0
    %50 = vmatpush1.msra.mxu0 %v21
    %51 = vmatprep.subr.mxu0 0.0
    %52 = vmatpush1.msra.mxu0 %v22
    %53 = vmatprep.subr.mxu0 0.0
    %54 = vmatpush1.msra.mxu0 %v23
    %55 = vmatprep.subr.mxu0 0.0
    %56 = vmatpush1.msra.mxu0 %v24
    %57 = vmatprep.subr.mxu0 0.0
    %58 = vmatpush1.msra.mxu0 %v25
    %59 = vmatprep.subr.mxu0 0.0
    %60 = vmatpush1.msra.mxu0 %v26
    %61 = vmatprep.subr.mxu0 0.0
    %62 = vmatpush1.msra.mxu0 %v27
    %63 = vmatprep.subr.mxu0 0.0
    %64 = vmatpush1.msra.mxu0 %v28
    %65 = vmatprep.subr.mxu0 0.0
    %66 = vmatpush1.msra.mxu0 %v29
    %67 = vmatprep.subr.mxu0 0.0
    %68 = vmatpush1.msra.mxu0 %v30
    %69 = vmatprep.subr.mxu0 0.0
    %70 = vmatpush1.msra.mxu0 %v31
    %71 = vmatprep.subr.mxu0 0.0
    %72 = vmatpush1.msra.mxu0 0.0
    %73 = vmatprep.subr.mxu0 0.0
    %74 = vmatpush1.msra.mxu0 0.0
    %75 = vmatprep.subr.mxu0 0.0
    %76 = vmatpush1.msra.mxu0 0.0
    %77 = vmatprep.subr.mxu0 0.0
    %78 = vmatpush1.msra.mxu0 0.0
    %79 = vmatprep.subr.mxu0 0.0
    %80 = vmatpush1.msra.mxu0 0.0
    %81 = vmatprep.subr.mxu0 0.0
    %82 = vmatpush1.msra.mxu0 0.0
    %83 = vmatprep.subr.mxu0 0.0
    %84 = vmatpush1.msra.mxu0 0.0
    %85 = vmatprep.subr.mxu0 0.0
    %86 = vmatpush1.msra.mxu0 0.0
    %87 = vmatprep.subr.mxu0 0.0
    %88 = vmatpush1.msra.mxu0 0.0
    %89 = vmatprep.subr.mxu0 0.0
    %90 = vmatpush1.msra.mxu0 0.0
    %91 = vmatprep.subr.mxu0 0.0
    %92 = vmatpush1.msra.mxu0 0.0
    %93 = vmatprep.subr.mxu0 0.0
    %94 = vmatpush1.msra.mxu0 0.0
    %95 = vmatprep.subr.mxu0 0.0
    %96 = vmatpush1.msra.mxu0 0.0
    %97 = vmatprep.subr.mxu0 0.0
    %98 = vmatpush1.msra.mxu0 0.0
    %99 = vmatprep.subr.mxu0 0.0
    %100 = vmatpush1.msra.mxu0 0.0
    %101 = vmatprep.subr.mxu0 0.0
    %102 = vmatpush1.msra.mxu0 0.0
    %103 = vmatprep.mubr.f32.mxu0 0.0
    %104 = vmatmul.mubr.f32.gmra.mrb[0].mxu0 %v15
    %v105 = vpop.f32.mrb[0].mxu0
    %v106 = vadd.f32 %v37, %v105
    %v107 = vpop.f32.mrb[0].mxu0
    %108 = vdwg.mxu0
    %v109 = vmul.f32 %v106, 0.5
    %v110 = vtanh.pop %v109
    %v111 = vadd.f32 %v110, 1.0
    %v112 = vmul.f32 %v111, 0.5
    %vm113 = vcmask 64512
    %114 = vst.msk [vmem:[#allocation2] sm:$0xff] %vm113, %v112
    // Predicated region
    $region14: #{tpu_custom_call.1} parent=1 // pred_check
      _
    $region15: #{tpu_custom_call.1} parent=1 // pred_check_branch
      %116 = sbr.rel (0) target = $region17
    $region16: #{tpu_custom_call.1} parent=1 // pred_region
      %s118 = ssub.s32 128, 64
      %119 = vsyncadd [#allocation3], %s118
      %s120 = sshll.u32 [#allocation2], 4
      %s121 = int_to_ptr.vmem [resolvable:$true] %s120
      %126 = dma.vmem_to_hbm [thread:$0]  %s121, 64, %s3, [#allocation3], 64, 64, 4
    $region17: #{tpu_custom_call.1} parent=1 // pred_fallthru
      _
    // Predicated region
    $region18: #{tpu_custom_call.1} parent=1 // pred_check
      _
    $region19: #{tpu_custom_call.1} parent=1 // pred_check_branch
      %128 = sbr.rel (0) target = $region21
    $region20: #{tpu_custom_call.1} parent=1 // pred_region
      %129 = dma.done [#allocation3], 128
    $region21: #{tpu_custom_call.1} parent=1 // pred_fallthru
      _
    %130 = vsyncpa [#allocation3], 1

</llo_original>
